<compile_context>
chip_gen: v6e
topology: v6e:2x2x1
jax: 0.10.0
libtpu: 0.0.40
codegen_flags: <defaults>
</compile_context>

<pallas_src>
import math
from functools import partial

import jax
import jax.numpy as jnp
from jax.experimental import pallas as pl
from jax.experimental.pallas import tpu as pltpu


# ----------------------------------------------------------------------------
# Fused kernel:  o = softmax(x @ D^T, axis=-1)
# ----------------------------------------------------------------------------

def _dict_softmax_kernel(x_ref, dt_ref, o_ref):
    # x_ref : [tm, atom_size]          (row tile of flattened inputs)
    # dt_ref: [atom_size, num_atoms]   (dictionary, pre-transposed -> lane-dense)
    # o_ref : [tm, num_atoms]
    sim = jnp.dot(x_ref[...], dt_ref[...], preferred_element_type=jnp.float32)

    # Numerically stable softmax over the lane (num_atoms) axis.
    m = jnp.max(sim, axis=-1, keepdims=True)
    e = jnp.exp(sim - m)
    s = jnp.sum(e, axis=-1, keepdims=True)

    # EUP approximate reciprocal + one Newton step (no vector divide).
    r = pl.reciprocal(s, approx=True)
    r = r * (2.0 - s * r)

    o_ref[...] = (e * r).astype(o_ref.dtype)


# ----------------------------------------------------------------------------
# Wrapper
# ----------------------------------------------------------------------------

@partial(jax.jit, static_argnames=("block_rows",))
def dictionary_forward(x, dictionary, *, block_rows=256):
    """softmax(x @ dictionary.T, axis=-1) via one fused Pallas call.

    x:          [..., atom_size]
    dictionary: [num_atoms, atom_size]
    returns:    [..., num_atoms]  (float32)
    """
    num_atoms, atom_size = dictionary.shape
    lead = x.shape[:-1]
    M = math.prod(lead) if lead else 1

    x2 = x.reshape(M, atom_size).astype(jnp.float32)
    dt = jnp.transpose(dictionary).astype(jnp.float32)  # [atom_size, num_atoms]

    # Row tile: multiple of 8 sublanes, capped at block_rows; pad rows if needed.
    tm = min(block_rows, M)
    tm = max(8, ((tm + 7) // 8) * 8)
    Mp = ((M + tm - 1) // tm) * tm
    if Mp != M:
        x2 = jnp.pad(x2, ((0, Mp - M), (0, 0)))

    grid = (Mp // tm,)

    out = pl.pallas_call(
        _dict_softmax_kernel,
        out_shape=jax.ShapeDtypeStruct((Mp, num_atoms), jnp.float32),
        grid=grid,
        in_specs=[
            pl.BlockSpec((tm, atom_size), lambda i: (i, 0)),         # x row tile
            pl.BlockSpec((atom_size, num_atoms), lambda i: (0, 0)),  # dictionary (resident)
        ],
        out_specs=pl.BlockSpec((tm, num_atoms), lambda i: (i, 0)),
        compiler_params=pltpu.CompilerParams(
            dimension_semantics=("parallel",),
        ),
    )(x2, dt)

    return out[:M].reshape(*lead, num_atoms)


# ----------------------------------------------------------------------------
# Main
# ----------------------------------------------------------------------------

if __name__ == "__main__":
    num_atoms = 64
    atom_size = 32
    batch, seq = 2, 8

    key = jax.random.PRNGKey(0)
    k_x, k_d = jax.random.split(key)
    x = jax.random.normal(k_x, (batch, seq, atom_size), jnp.float32)
    dictionary = jax.random.normal(k_d, (num_atoms, atom_size), jnp.float32)

    out = dictionary_forward(x, dictionary)
    out = jax.block_until_ready(out)

    # Reference (plain JAX) check of the forward semantics.
    ref = jax.nn.softmax(jnp.einsum("bsa,na->bsn", x, dictionary), axis=-1)
    assert out.shape == (batch, seq, num_atoms)
    assert bool(jnp.all(jnp.isfinite(out)))
    assert bool(jnp.allclose(out, ref, rtol=1e-3, atol=1e-5))

    # TODO(synk): orthogonality_loss() is a training-time regularizer, not part
    # of forward(); omitted.
    print("KERNEL_OK")
</pallas_src>

<mosaic_0001>
module attributes {stable_mosaic.version = 11 : i64} {
  func.func @_dict_softmax_kernel(%arg0: i32, %arg1: memref<16x32xf32, #tpu.memory_space<vmem>>, %arg2: memref<32x64xf32, #tpu.memory_space<vmem>>, %arg3: memref<16x64xf32, #tpu.memory_space<vmem>>) attributes {dimension_semantics = [#tpu.dimension_semantics<parallel>], iteration_bounds = array<i64: 1>, scalar_prefetch = 0 : i64, scratch_operands = 0 : i64, tpu.core_type = #tpu.core_type<tc>, window_params = [{transform_indices = @transform_0, window_bounds = array<i64: 16, 32>}, {pipeline_mode = #tpu.pipeline_mode<synchronous>, transform_indices = @transform_1, window_bounds = array<i64: 32, 64>}, {transform_indices = @transform_2, window_bounds = array<i64: 16, 64>}]} {
    %c0 = arith.constant 0 : index
    %c0_0 = arith.constant 0 : index
    %0 = vector.load %arg1[%c0, %c0_0] : memref<16x32xf32, #tpu.memory_space<vmem>>, vector<16x32xf32>
    %c0_1 = arith.constant 0 : index
    %c0_2 = arith.constant 0 : index
    %1 = vector.load %arg2[%c0_1, %c0_2] : memref<32x64xf32, #tpu.memory_space<vmem>>, vector<32x64xf32>
    %cst = arith.constant dense<0.000000e+00> : vector<16x64xf32>
    %2 = tpu.matmul %0, %1, %cst {dimension_numbers = #tpu.dot_dimension_numbers<[1], [0], [0], [1], [0, 0, 1, 1], [], []>} : vector<16x32xf32>, vector<32x64xf32>, vector<16x64xf32> -> vector<16x64xf32>
    %cst_3 = arith.constant dense<0xFF800000> : vector<16xf32>
    %3 = vector.multi_reduction <maximumf>, %2, %cst_3 [1] : vector<16x64xf32> to vector<16xf32>
    %4 = vector.shape_cast %3 : vector<16xf32> to vector<16x1xf32>
    %5 = vector.broadcast %4 : vector<16x1xf32> to vector<16x64xf32>
    %6 = arith.subf %2, %5 : vector<16x64xf32>
    %7 = math.exp %6 : vector<16x64xf32>
    %cst_4 = arith.constant dense<0.000000e+00> : vector<16xf32>
    %8 = vector.multi_reduction <add>, %7, %cst_4 [1] : vector<16x64xf32> to vector<16xf32>
    %9 = vector.shape_cast %8 : vector<16xf32> to vector<16x1xf32>
    %10 = tpu.reciprocal %9 {approx = true} : vector<16x1xf32> -> vector<16x1xf32>
    %11 = arith.mulf %9, %10 : vector<16x1xf32>
    %cst_5 = arith.constant 2.000000e+00 : f32
    %12 = vector.broadcast %cst_5 : f32 to vector<16x1xf32>
    %13 = arith.subf %12, %11 : vector<16x1xf32>
    %14 = arith.mulf %10, %13 : vector<16x1xf32>
    %15 = vector.broadcast %14 : vector<16x1xf32> to vector<16x64xf32>
    %16 = arith.mulf %7, %15 : vector<16x64xf32>
    %c0_6 = arith.constant 0 : index
    %c0_7 = arith.constant 0 : index
    %17 = vector.load %arg3[%c0_6, %c0_7] : memref<16x64xf32, #tpu.memory_space<vmem>>, vector<16x64xf32>
    tpu.vector_store %arg3[%c0_6, %c0_7], %16 {strides = array<i32>} : memref<16x64xf32, #tpu.memory_space<vmem>>, vector<16x64xf32>,
    return
  }
  func.func @transform_0(%arg0: i32) -> (i32, i32) {
    %c0_i32 = arith.constant 0 : i32
    %c0_i32_0 = arith.constant 0 : i32
    return %arg0, %c0_i32 : i32, i32
  }
  func.func @transform_1(%arg0: i32) -> (i32, i32) {
    %c0_i32 = arith.constant 0 : i32
    %c0_i32_0 = arith.constant 0 : i32
    %c0_i32_1 = arith.constant 0 : i32
    return %c0_i32, %c0_i32_0 : i32, i32
  }
  func.func @transform_2(%arg0: i32) -> (i32, i32) {
    %c0_i32 = arith.constant 0 : i32
    %c0_i32_0 = arith.constant 0 : i32
    return %arg0, %c0_i32 : i32, i32
  }
}

</mosaic_0001>

<llo_original>
// kernel: dictionary_forward.1
$region0: #{dictionary_forward.1}
  #allocation0 [shape = 'u32[]', space=smem, size = 0x4, offset = 0x4, fixed_abs, tag = 'smem constant byte address 0x4 - core index']
  #allocation1 [shape = 'u32[144,128]{1,0:T(1,128)}', space=vmem, size = 0x12000, scoped, tag = 'internal scratch']
  %s0 = inlined_call_operand.hbm [shape: f32[16,32], index: 0, kind: input, shape index: {}]
  %s1 = inlined_call_operand.hbm [shape: f32[32,64], index: 1, kind: input, shape index: {}]
  %s2 = inlined_call_operand.hbm [shape: f32[16,64], index: 2, kind: output, shape index: {}]
  %s3 = sld [smem:[#allocation0]]
  $region26: #{dictionary_forward.1} parent=0
    _
  %s5 = ssub.s32 1, %s3
  %s6 = scalar_select 0, %s5, %s3
  $region1: #{dictionary_forward.1} parent=0
    #allocation2 [shape = 'u8[8192]{0}', space=vmem, size = 0x2000, scoped, tag = 'input window, operand 0, single buffered']
    #allocation3 [shape = 's32[1]{0}', space=sflag, size = 0x4, scoped, tag = 'scoped memory for dictionary_forward.1']
    #allocation4 [shape = 's32[1]{0}', space=sflag, size = 0x4, scoped, tag = 'scoped memory for dictionary_forward.1']
    #allocation5 [shape = 'u8[16384]{0}', space=vmem, size = 0x4000, scoped, tag = 'input window, operand 1, single buffered']
    #allocation6 [shape = 's32[1]{0}', space=sflag, size = 0x4, scoped, tag = 'scoped memory for dictionary_forward.1']
    #allocation7 [shape = 'u8[8192]{0}', space=vmem, size = 0x2000, scoped, tag = 'output window, operand 0, single buffered']
    %7 = vsyncpa [#allocation3], 0
    %8 = vsyncpa [#allocation6], 0
    %9 = vsyncpa [#allocation4], 0
    // Predicated region
    $region2: #{dictionary_forward.1} parent=1 // pred_check
      _
    $region3: #{dictionary_forward.1} parent=1 // pred_check_branch
      %11 = sbr.rel (0) target = $region5
    $region4: #{dictionary_forward.1} parent=1 // pred_region
      %s13 = ssub.s32 256, 256
      %14 = vsyncadd [#allocation3], %s13
      %s15 = sshll.u32 [#allocation2], 4
      %s16 = int_to_ptr.vmem [resolvable:$true] %s15
      %21 = dma.hbm_to_vmem [thread:$0]  %s0, 256, %s16, [#allocation3], 128, 128, 8
    $region5: #{dictionary_forward.1} parent=1 // pred_fallthru
      _
    // Predicated region
    $region6: #{dictionary_forward.1} parent=1 // pred_check
      _
    $region7: #{dictionary_forward.1} parent=1 // pred_check_branch
      %23 = sbr.rel (0) target = $region9
    $region8: #{dictionary_forward.1} parent=1 // pred_region
      %s25 = ssub.s32 512, 512
      %26 = vsyncadd [#allocation6], %s25
      %s27 = sshll.u32 [#allocation5], 4
      %s28 = int_to_ptr.vmem [resolvable:$true] %s27
      %33 = dma.hbm_to_vmem [thread:$0]  %s1, 512, %s28, [#allocation6], 128, 128, 8
    $region9: #{dictionary_forward.1} parent=1 // pred_fallthru
      _
    // Predicated region
    $region10: #{dictionary_forward.1} parent=1 // pred_check
      _
    $region11: #{dictionary_forward.1} parent=1 // pred_check_branch
      %35 = sbr.rel (0) target = $region13
    $region12: #{dictionary_forward.1} parent=1 // pred_region
      %36 = dma.done [#allocation3], 256
    $region13: #{dictionary_forward.1} parent=1 // pred_fallthru
      _
    // Predicated region
    $region14: #{dictionary_forward.1} parent=1 // pred_check
      _
    $region15: #{dictionary_forward.1} parent=1 // pred_check_branch
      %38 = sbr.rel (0) target = $region17
    $region16: #{dictionary_forward.1} parent=1 // pred_region
      %39 = dma.done [#allocation6], 512
    $region17: #{dictionary_forward.1} parent=1 // pred_fallthru
      _
    %v40 = vld [vmem:[#allocation2] sm:$0xff]
    %v41 = vld [vmem:[#allocation2 + $0x8] sm:$0xff]
    %v42 = vld [vmem:[#allocation5] sm:$0xff]
    %v43 = vld [vmem:[#allocation5 + $0x8] sm:$0xff]
    %v44 = vld [vmem:[#allocation5 + $0x10] sm:$0xff]
    %v45 = vld [vmem:[#allocation5 + $0x18] sm:$0xff]
    %vm46 = vcmask 261120
    %v48 = vsel %vm46, %v40, 0
    %v51 = vsel %vm46, %v41, 0
    %53 = vmatprep.subr.mxu0 0.0
    %54 = vmatpush1.msra.mxu0 0.0
    %55 = vmatprep.subr.mxu0 0.0
    %56 = vmatpush1.msra.mxu0 0.0
    %57 = vmatprep.subr.mxu0 0.0
    %58 = vmatpush1.msra.mxu0 0.0
    %59 = vmatprep.subr.mxu0 0.0
    %60 = vmatpush1.msra.mxu0 0.0
    %61 = vmatprep.subr.mxu0 0.0
    %62 = vmatpush1.msra.mxu0 0.0
    %63 = vmatprep.subr.mxu0 0.0
    %64 = vmatpush1.msra.mxu0 0.0
    %65 = vmatprep.subr.mxu0 0.0
    %66 = vmatpush1.msra.mxu0 0.0
    %67 = vmatprep.subr.mxu0 0.0
    %68 = vmatpush1.msra.mxu0 0.0
    %69 = vmatprep.subr.mxu0 0.0
    %70 = vmatpush1.msra.mxu0 0.0
    %71 = vmatprep.subr.mxu0 0.0
    %72 = vmatpush1.msra.mxu0 0.0
    %73 = vmatprep.subr.mxu0 0.0
    %74 = vmatpush1.msra.mxu0 0.0
    %75 = vmatprep.subr.mxu0 0.0
    %76 = vmatpush1.msra.mxu0 0.0
    %77 = vmatprep.subr.mxu0 0.0
    %78 = vmatpush1.msra.mxu0 %v45
    %79 = vmatprep.subr.mxu0 0.0
    %80 = vmatpush1.msra.mxu0 %v44
    %81 = vmatprep.subr.mxu0 0.0
    %82 = vmatpush1.msra.mxu0 %v43
    %83 = vmatprep.subr.mxu0 0.0
    %84 = vmatpush1.msra.mxu0 %v42
    %85 = vmatprep.subr.mxu0 0.0
    %86 = vmatpush2.msra.mxu0 0.0
    %87 = vmatprep.subr.mxu0 0.0
    %88 = vmatpush2.msra.mxu0 0.0
    %89 = vmatprep.subr.mxu0 0.0
    %90 = vmatpush2.msra.mxu0 0.0
    %91 = vmatprep.subr.mxu0 0.0
    %92 = vmatpush2.msra.mxu0 0.0
    %93 = vmatprep.subr.mxu0 0.0
    %94 = vmatpush2.msra.mxu0 0.0
    %95 = vmatprep.subr.mxu0 0.0
    %96 = vmatpush2.msra.mxu0 0.0
    %97 = vmatprep.subr.mxu0 0.0
    %98 = vmatpush2.msra.mxu0 0.0
    %99 = vmatprep.subr.mxu0 0.0
    %100 = vmatpush2.msra.mxu0 0.0
    %101 = vmatprep.subr.mxu0 0.0
    %102 = vmatpush2.msra.mxu0 0.0
    %103 = vmatprep.subr.mxu0 0.0
    %104 = vmatpush2.msra.mxu0 0.0
    %105 = vmatprep.subr.mxu0 0.0
    %106 = vmatpush2.msra.mxu0 0.0
    %107 = vmatprep.subr.mxu0 0.0
    %108 = vmatpush2.msra.mxu0 0.0
    %109 = vmatprep.subr.mxu0 0.0
    %110 = vmatpush2.msra.mxu0 0.0
    %111 = vmatprep.subr.mxu0 0.0
    %112 = vmatpush2.msra.mxu0 0.0
    %113 = vmatprep.subr.mxu0 0.0
    %114 = vmatpush2.msra.mxu0 0.0
    %115 = vmatprep.subr.mxu0 0.0
    %116 = vmatpush2.msra.mxu0 0.0
    %117 = vmatprep.mubr.f32.mxu0 0.0
    %118 = vmatmul.mubr.f32.gmra.mxu0 %v48
    %v119 = vpop.f32.mrf.mxu0
    %v120 = vadd.f32 0.0, %v119
    %v121 = vpop.f32.mrf.mxu0
    %122 = vmatprep.mubr.f32.mxu0 0.0
    %123 = vmatmul.mubr.f32.gmra.mxu0 %v51
    %v124 = vpop.f32.mrf.mxu0
    %v125 = vadd.f32 0.0, %v124
    %v126 = vpop.f32.mrf.mxu0
    %127 = vdwg.mxu0
    %vm128 = vcmask 523264
    %v129 = vsel %vm128, %v120, -inf
    %130 = vmax.xlane.f32.xlu0 %v129
    %v131 = vpop.xlane.xlu0 %130
    %v132 = vsel %vm128, %v125, -inf
    %133 = vmax.xlane.f32.xlu0 %v132
    %v134 = vpop.xlane.xlu0 %133
    %v135 = vsub.f32 %v120, %v131
    %v136 = vsub.f32 %v125, %v134
    %v137 = vmul.f32 %v135, 1.442695
    %v138 = vpow.pop %v137
    %v139 = vmul.f32 %v136, 1.442695
    %v140 = vpow.pop %v139
    %v141 = vsel %vm128, %v138, 0.0
    %142 = vadd.xlane.f32.xlu0 %v141
    %v143 = vpop.xlane.xlu0 %142
    %v144 = vsel %vm128, %v140, 0.0
    %145 = vadd.xlane.f32.xlu0 %v144
    %v146 = vpop.xlane.xlu0 %145
    %v147 = vrcp.pop %v143
    %v148 = vrcp.pop %v146
    %v149 = vmul.f32 %v143, %v147
    %v150 = vmul.f32 %v146, %v148
    %v151 = vsub.f32 2.0, %v149
    %v152 = vsub.f32 2.0, %v150
    %v153 = vmul.f32 %v147, %v151
    %v154 = vmul.f32 %v148, %v152
    %v155 = vmul.f32 %v138, %v153
    %v156 = vmul.f32 %v140, %v154
    %157 = vst.msk [vmem:[#allocation7] sm:$0xff] %vm128, %v155
    %158 = vst.msk [vmem:[#allocation7 + $0x8] sm:$0xff] %vm128, %v156
    // Predicated region
    $region18: #{dictionary_forward.1} parent=1 // pred_check
      _
    $region19: #{dictionary_forward.1} parent=1 // pred_check_branch
      %160 = sbr.rel (0) target = $region21
    $region20: #{dictionary_forward.1} parent=1 // pred_region
      %s162 = ssub.s32 256, 256
      %163 = vsyncadd [#allocation4], %s162
      %s164 = sshll.u32 [#allocation7], 4
      %s165 = int_to_ptr.vmem [resolvable:$true] %s164
      %170 = dma.vmem_to_hbm [thread:$0]  %s165, 256, %s2, [#allocation4], 128, 128, 8
    $region21: #{dictionary_forward.1} parent=1 // pred_fallthru
      _
    // Predicated region
    $region22: #{dictionary_forward.1} parent=1 // pred_check
      _
    $region23: #{dictionary_forward.1} parent=1 // pred_check_branch
      %172 = sbr.rel (0) target = $region25
    $region24: #{dictionary_forward.1} parent=1 // pred_region
      %173 = dma.done [#allocation4], 256
    $region25: #{dictionary_forward.1} parent=1 // pred_fallthru
      _
    %174 = vsyncpa [#allocation3], 1
    %175 = vsyncpa [#allocation6], 1
    %176 = vsyncpa [#allocation4], 1

</llo_original>
